<compile_context>
chip_gen: v6e
topology: v6e:2x2x1
jax: 0.10.0
libtpu: 0.0.40
codegen_flags: <defaults>
</compile_context>

<pallas_src>
import functools

import jax
import jax.numpy as jnp
from jax.experimental import pallas as pl
from jax.experimental.pallas import tpu as pltpu

_LANE = 128      # lane width (last dim)
_SUBLANE = 8     # f32 sublane granularity (second-to-last dim)


def _round_up(n: int, m: int) -> int:
    return ((n + m - 1) // m) * m


def _make_decoder_kernel(num_layers: int, final_sigmoid: bool, compute_dtype):
    """Builds the fused MLP kernel that processes one (TB, D) batch tile."""

    def kernel(*refs):
        # refs = (x_ref, w0, b0, w1, b1, ..., w_{L-1}, b_{L-1}, o_ref)
        x_ref = refs[0]
        o_ref = refs[-1]
        wb = refs[1:-1]

        h = x_ref[...]                                    # (TB, D0) compute_dtype
        for li in range(num_layers):
            w = wb[2 * li][...]                           # (Din, Dout) compute_dtype
            b = wb[2 * li + 1][...].astype(jnp.float32)   # (1, Dout)   f32
            acc = jnp.dot(h, w, preferred_element_type=jnp.float32) + b
            if li < num_layers - 1:
                acc = jnp.where(acc > 0, acc, 0.2 * acc)  # LeakyReLU(0.2), f32
                h = acc.astype(compute_dtype)             # bf16 operand for next MXU
            else:
                h = acc                                   # final layer stays f32
        if final_sigmoid:
            h = jax.nn.sigmoid(h)
        o_ref[...] = h.astype(o_ref.dtype)

    return kernel


def decoder_forward(x, weights, biases, *, final_sigmoid=False,
                    compute_dtype=jnp.bfloat16, block_batch=512):
    """Decoder MLP forward pass with a single pallas_call.

    x:       (B, latent_dim + cond_dim) float32
    weights: list of (in_dim_i, out_dim_i) float32  (== PyTorch W.T)
    biases:  list of (1, out_dim_i)      float32
    """
    num_layers = len(weights)
    B, in_dim = x.shape
    out_dim = weights[-1].shape[1]

    # Padded (lane-dense) feature dims for every layer boundary.
    dims = [in_dim] + [w.shape[1] for w in weights]
    dims_p = [_round_up(d, _LANE) for d in dims]

    # Batch tile: multiple of 8 sublanes, at most block_batch; pad B to a whole
    # number of tiles so every grid step sees a full, unmasked tile.
    tb = min(_round_up(block_batch, _SUBLANE), _round_up(B, _SUBLANE))
    b_pad = _round_up(B, tb)
    grid = (b_pad // tb,)

    # Zero-pad + cast operands. (A production caller would pre-pad the params
    # once outside the hot path; the padded copies here are tiny.)
    x_p = jnp.zeros((b_pad, dims_p[0]), compute_dtype)
    x_p = x_p.at[:B, :in_dim].set(x.astype(compute_dtype))

    operands = [x_p]
    in_specs = [pl.BlockSpec((tb, dims_p[0]), lambda i: (i, 0))]
    for li, (w, b) in enumerate(zip(weights, biases)):
        din, dout = w.shape
        din_p, dout_p = dims_p[li], dims_p[li + 1]
        w_p = jnp.zeros((din_p, dout_p), compute_dtype).at[:din, :dout].set(
            w.astype(compute_dtype))
        b_p = jnp.zeros((1, dout_p), jnp.float32).at[:, :dout].set(
            jnp.reshape(b, (1, dout)).astype(jnp.float32))
        operands += [w_p, b_p]
        # Constant index_map -> params DMA'd once, resident across all steps.
        in_specs += [pl.BlockSpec((din_p, dout_p), lambda i: (0, 0)),
                     pl.BlockSpec((1, dout_p), lambda i: (0, 0))]

    kernel = _make_decoder_kernel(num_layers, final_sigmoid, compute_dtype)

    out_p = pl.pallas_call(
        kernel,
        grid=grid,
        in_specs=in_specs,
        out_specs=pl.BlockSpec((tb, dims_p[-1]), lambda i: (i, 0)),
        out_shape=jax.ShapeDtypeStruct((b_pad, dims_p[-1]), jnp.float32),
        compiler_params=pltpu.CompilerParams(
            dimension_semantics=("parallel",)),
    )(*operands)

    # Drop batch padding and the zero-padded output lanes.
    return out_p[:B, :out_dim]


def init_decoder_params(key, layer_dims, latent_dim, cond_dim):
    """Deterministic parameter init mirroring the PyTorch module's shapes."""
    input_size = latent_dim + cond_dim
    dims = [input_size] + list(layer_dims)   # chain: in -> d0 -> ... -> d_{L-1}
    weights, biases = [], []
    for din, dout in zip(dims[:-1], dims[1:]):
        key, kw, kb = jax.random.split(key, 3)
        bound = 1.0 / jnp.sqrt(din)
        # (in_dim, out_dim) layout so the kernel does x @ W (== PyTorch x @ W.T)
        w = jax.random.uniform(kw, (din, dout), jnp.float32, -bound, bound)
        b = jax.random.uniform(kb, (1, dout), jnp.float32, -bound, bound)
        weights.append(w)
        biases.append(b)
    return weights, biases


def reference_forward(x, weights, biases, *, final_sigmoid=False):
    """Plain f32 JAX reference (PyTorch-equivalent semantics)."""
    h = x
    n = len(weights)
    for i, (w, b) in enumerate(zip(weights, biases)):
        h = h @ w + b
        if i < n - 1:
            h = jnp.where(h > 0, h, 0.2 * h)
    if final_sigmoid:
        h = jax.nn.sigmoid(h)
    return h


def reference_forward_mixed(x, weights, biases, *, final_sigmoid=False,
                            compute_dtype=jnp.bfloat16):
    """Reference that mirrors the kernel's bf16-operand / f32-accumulate math."""
    h = x.astype(compute_dtype)
    n = len(weights)
    for i, (w, b) in enumerate(zip(weights, biases)):
        acc = jnp.dot(h, w.astype(compute_dtype),
                      preferred_element_type=jnp.float32) + b.astype(jnp.float32)
        if i < n - 1:
            acc = jnp.where(acc > 0, acc, 0.2 * acc)
            h = acc.astype(compute_dtype)
        else:
            h = acc
    if final_sigmoid:
        h = jax.nn.sigmoid(h)
    return h


if __name__ == "__main__":
    # Shapes consistent with the module: x is (batch, latent_dim + cond_dim).
    # batch=200 and block_batch=64 exercise the batch-tiled grid (4 steps) and
    # the batch-padding path (200 -> 256 padded rows) while staying small.
    batch = 200
    latent_dim = 8
    cond_dim = 24
    layer_dims = [64, 64, 48]
    final_sigmoid = True

    key = jax.random.PRNGKey(0)
    key, kx = jax.random.split(key)
    x = jax.random.normal(kx, (batch, latent_dim + cond_dim), jnp.float32)

    weights, biases = init_decoder_params(key, layer_dims, latent_dim, cond_dim)

    fwd = jax.jit(functools.partial(decoder_forward,
                                    final_sigmoid=final_sigmoid,
                                    compute_dtype=jnp.bfloat16,
                                    block_batch=64))
    out = jax.block_until_ready(fwd(x, weights, biases))

    ref_mixed = reference_forward_mixed(x, weights, biases,
                                        final_sigmoid=final_sigmoid)
    ref_f32 = reference_forward(x, weights, biases, final_sigmoid=final_sigmoid)

    assert out.shape == (batch, layer_dims[-1]), out.shape
    # Tight check vs. a reference using the same bf16-operand / f32-accum math.
    assert jnp.allclose(out, ref_mixed, atol=1e-3, rtol=1e-3), \
        "mismatch vs mixed-precision reference"
    # Loose check vs. the pure-f32 PyTorch-equivalent reference (bf16 rounding).
    assert jnp.allclose(out, ref_f32, atol=5e-2, rtol=5e-2), \
        "mismatch vs f32 reference"

    print("KERNEL_OK")
</pallas_src>

<mosaic_0001>
module attributes {stable_mosaic.version = 11 : i64} {
  func.func @kernel(%arg0: i32, %arg1: memref<64x128xbf16, #tpu.memory_space<vmem>>, %arg2: memref<128x128xbf16, #tpu.memory_space<vmem>>, %arg3: memref<1x128xf32, #tpu.memory_space<vmem>>, %arg4: memref<128x128xbf16, #tpu.memory_space<vmem>>, %arg5: memref<1x128xf32, #tpu.memory_space<vmem>>, %arg6: memref<128x128xbf16, #tpu.memory_space<vmem>>, %arg7: memref<1x128xf32, #tpu.memory_space<vmem>>, %arg8: memref<64x128xf32, #tpu.memory_space<vmem>>) attributes {dimension_semantics = [#tpu.dimension_semantics<parallel>], iteration_bounds = array<i64: 4>, scalar_prefetch = 0 : i64, scratch_operands = 0 : i64, tpu.core_type = #tpu.core_type<tc>, window_params = [{transform_indices = @transform_0, window_bounds = array<i64: 64, 128>}, {pipeline_mode = #tpu.pipeline_mode<synchronous>, transform_indices = @transform_1, window_bounds = array<i64: 128, 128>}, {pipeline_mode = #tpu.pipeline_mode<synchronous>, transform_indices = @transform_2, window_bounds = array<i64: 1, 128>}, {pipeline_mode = #tpu.pipeline_mode<synchronous>, transform_indices = @transform_3, window_bounds = array<i64: 128, 128>}, {pipeline_mode = #tpu.pipeline_mode<synchronous>, transform_indices = @transform_4, window_bounds = array<i64: 1, 128>}, {pipeline_mode = #tpu.pipeline_mode<synchronous>, transform_indices = @transform_5, window_bounds = array<i64: 128, 128>}, {pipeline_mode = #tpu.pipeline_mode<synchronous>, transform_indices = @transform_6, window_bounds = array<i64: 1, 128>}, {transform_indices = @transform_7, window_bounds = array<i64: 64, 128>}]} {
    %c0 = arith.constant 0 : index
    %c0_0 = arith.constant 0 : index
    %0 = vector.load %arg1[%c0, %c0_0] : memref<64x128xbf16, #tpu.memory_space<vmem>>, vector<64x128xbf16>
    %c0_1 = arith.constant 0 : index
    %c0_2 = arith.constant 0 : index
    %1 = vector.load %arg2[%c0_1, %c0_2] : memref<128x128xbf16, #tpu.memory_space<vmem>>, vector<128x128xbf16>
    %c0_3 = arith.constant 0 : index
    %c0_4 = arith.constant 0 : index
    %2 = vector.load %arg3[%c0_3, %c0_4] : memref<1x128xf32, #tpu.memory_space<vmem>>, vector<1x128xf32>
    %cst = arith.constant dense<0.000000e+00> : vector<64x128xf32>
    %3 = tpu.matmul %0, %1, %cst {dimension_numbers = #tpu.dot_dimension_numbers<[1], [0], [0], [1], [0, 0, 1, 1], [], []>} : vector<64x128xbf16>, vector<128x128xbf16>, vector<64x128xf32> -> vector<64x128xf32>
    %4 = vector.broadcast %2 : vector<1x128xf32> to vector<64x128xf32>
    %5 = arith.addf %3, %4 : vector<64x128xf32>
    %cst_5 = arith.constant 0.000000e+00 : f32
    %6 = vector.broadcast %cst_5 : f32 to vector<64x128xf32>
    %7 = arith.cmpf ogt, %5, %6 : vector<64x128xf32>
    %cst_6 = arith.constant 2.000000e-01 : f32
    %8 = vector.broadcast %cst_6 : f32 to vector<64x128xf32>
    %9 = arith.mulf %8, %5 : vector<64x128xf32>
    %10 = arith.select %7, %5, %9 : vector<64x128xi1>, vector<64x128xf32>
    %11 = arith.truncf %10 : vector<64x128xf32> to vector<64x128xbf16>
    %c0_7 = arith.constant 0 : index
    %c0_8 = arith.constant 0 : index
    %12 = vector.load %arg4[%c0_7, %c0_8] : memref<128x128xbf16, #tpu.memory_space<vmem>>, vector<128x128xbf16>
    %c0_9 = arith.constant 0 : index
    %c0_10 = arith.constant 0 : index
    %13 = vector.load %arg5[%c0_9, %c0_10] : memref<1x128xf32, #tpu.memory_space<vmem>>, vector<1x128xf32>
    %cst_11 = arith.constant dense<0.000000e+00> : vector<64x128xf32>
    %14 = tpu.matmul %11, %12, %cst_11 {dimension_numbers = #tpu.dot_dimension_numbers<[1], [0], [0], [1], [0, 0, 1, 1], [], []>} : vector<64x128xbf16>, vector<128x128xbf16>, vector<64x128xf32> -> vector<64x128xf32>
    %15 = vector.broadcast %13 : vector<1x128xf32> to vector<64x128xf32>
    %16 = arith.addf %14, %15 : vector<64x128xf32>
    %cst_12 = arith.constant 0.000000e+00 : f32
    %17 = vector.broadcast %cst_12 : f32 to vector<64x128xf32>
    %18 = arith.cmpf ogt, %16, %17 : vector<64x128xf32>
    %cst_13 = arith.constant 2.000000e-01 : f32
    %19 = vector.broadcast %cst_13 : f32 to vector<64x128xf32>
    %20 = arith.mulf %19, %16 : vector<64x128xf32>
    %21 = arith.select %18, %16, %20 : vector<64x128xi1>, vector<64x128xf32>
    %22 = arith.truncf %21 : vector<64x128xf32> to vector<64x128xbf16>
    %c0_14 = arith.constant 0 : index
    %c0_15 = arith.constant 0 : index
    %23 = vector.load %arg6[%c0_14, %c0_15] : memref<128x128xbf16, #tpu.memory_space<vmem>>, vector<128x128xbf16>
    %c0_16 = arith.constant 0 : index
    %c0_17 = arith.constant 0 : index
    %24 = vector.load %arg7[%c0_16, %c0_17] : memref<1x128xf32, #tpu.memory_space<vmem>>, vector<1x128xf32>
    %cst_18 = arith.constant dense<0.000000e+00> : vector<64x128xf32>
    %25 = tpu.matmul %22, %23, %cst_18 {dimension_numbers = #tpu.dot_dimension_numbers<[1], [0], [0], [1], [0, 0, 1, 1], [], []>} : vector<64x128xbf16>, vector<128x128xbf16>, vector<64x128xf32> -> vector<64x128xf32>
    %26 = vector.broadcast %24 : vector<1x128xf32> to vector<64x128xf32>
    %27 = arith.addf %25, %26 : vector<64x128xf32>
    %28 = arith.negf %27 : vector<64x128xf32>
    %29 = math.exp %28 : vector<64x128xf32>
    %cst_19 = arith.constant 1.000000e+00 : f32
    %30 = vector.broadcast %cst_19 : f32 to vector<64x128xf32>
    %31 = arith.addf %30, %29 : vector<64x128xf32>
    %32 = arith.divf %30, %31 : vector<64x128xf32>
    %c0_20 = arith.constant 0 : index
    %c0_21 = arith.constant 0 : index
    %33 = vector.load %arg8[%c0_20, %c0_21] : memref<64x128xf32, #tpu.memory_space<vmem>>, vector<64x128xf32>
    tpu.vector_store %arg8[%c0_20, %c0_21], %32 {strides = array<i32>} : memref<64x128xf32, #tpu.memory_space<vmem>>, vector<64x128xf32>,
    return
  }
  func.func @transform_0(%arg0: i32) -> (i32, i32) {
    %c0_i32 = arith.constant 0 : i32
    %c0_i32_0 = arith.constant 0 : i32
    return %arg0, %c0_i32 : i32, i32
  }
  func.func @transform_1(%arg0: i32) -> (i32, i32) {
    %c0_i32 = arith.constant 0 : i32
    %c0_i32_0 = arith.constant 0 : i32
    %c0_i32_1 = arith.constant 0 : i32
    return %c0_i32, %c0_i32_0 : i32, i32
  }
  func.func @transform_2(%arg0: i32) -> (i32, i32) {
    %c0_i32 = arith.constant 0 : i32
    %c0_i32_0 = arith.constant 0 : i32
    %c0_i32_1 = arith.constant 0 : i32
    return %c0_i32, %c0_i32_0 : i32, i32
  }
  func.func @transform_3(%arg0: i32) -> (i32, i32) {
    %c0_i32 = arith.constant 0 : i32
    %c0_i32_0 = arith.constant 0 : i32
    %c0_i32_1 = arith.constant 0 : i32
    return %c0_i32, %c0_i32_0 : i32, i32
  }
  func.func @transform_4(%arg0: i32) -> (i32, i32) {
    %c0_i32 = arith.constant 0 : i32
    %c0_i32_0 = arith.constant 0 : i32
    %c0_i32_1 = arith.constant 0 : i32
    return %c0_i32, %c0_i32_0 : i32, i32
  }
  func.func @transform_5(%arg0: i32) -> (i32, i32) {
    %c0_i32 = arith.constant 0 : i32
    %c0_i32_0 = arith.constant 0 : i32
    %c0_i32_1 = arith.constant 0 : i32
    return %c0_i32, %c0_i32_0 : i32, i32
  }
  func.func @transform_6(%arg0: i32) -> (i32, i32) {
    %c0_i32 = arith.constant 0 : i32
    %c0_i32_0 = arith.constant 0 : i32
    %c0_i32_1 = arith.constant 0 : i32
    return %c0_i32, %c0_i32_0 : i32, i32
  }
  func.func @transform_7(%arg0: i32) -> (i32, i32) {
    %c0_i32 = arith.constant 0 : i32
    %c0_i32_0 = arith.constant 0 : i32
    return %arg0, %c0_i32 : i32, i32
  }
}

</mosaic_0001>

<llo_original>
// kernel: decoder_forward.1
$region0: #{decoder_forward.1}
  #allocation0 [shape = 'u32[]', space=smem, size = 0x4, offset = 0x4, fixed_abs, tag = 'smem constant byte address 0x4 - core index']
  #allocation1 [shape = 'u32[144,128]{1,0:T(1,128)}', space=vmem, size = 0x12000, scoped, tag = 'internal scratch']
  %s0 = inlined_call_operand.vmem [shape: bf16[256,128], index: 0, kind: input, shape index: {}]
  %s1 = inlined_call_operand.vmem [shape: bf16[128,128], index: 1, kind: input, shape index: {}]
  %s2 = inlined_call_operand.vmem [shape: f32[1,128], index: 2, kind: input, shape index: {}]
  %s3 = inlined_call_operand.vmem [shape: bf16[128,128], index: 3, kind: input, shape index: {}]
  %s4 = inlined_call_operand.vmem [shape: f32[1,128], index: 4, kind: input, shape index: {}]
  %s5 = inlined_call_operand.vmem [shape: bf16[128,128], index: 5, kind: input, shape index: {}]
  %s6 = inlined_call_operand.vmem [shape: f32[1,128], index: 6, kind: input, shape index: {}]
  %s7 = inlined_call_operand.vmem [shape: f32[256,128], index: 7, kind: output, shape index: {}]
  %s8 = sld [smem:[#allocation0]]
  $region61: #{decoder_forward.1} parent=0
    _
  %s10 = ssub.s32 1, %s8
  %s11 = scalar_select 0, %s10, %s8
  loop: start=0, step=1, limit=6
  $region2: #{decoder_forward.1} parent=0 // loop_pre_header
    _
  $region3: #{decoder_forward.1} parent=0 // loop_header
    %s13 = sphi 0, %s17
    %p14 = scmp.ge.s32.totalorder %s13, 6
    %s23 = sphi 0, %s25
    %s26 = sphi 0, %s23
    %s27 = sphi 0, %s26
    %s43 = sphi 0, %s27
    %s47 = sphi 0, %s47
    %s49 = sphi 0, %s47
    %s50 = sphi 0, %s49
    %s64 = sphi 0, %s50
    %s68 = sphi 0, %s68
    %s70 = sphi 0, %s68
    %s71 = sphi 0, %s70
    %s85 = sphi 0, %s71
    %s89 = sphi 0, %s89
    %s91 = sphi 0, %s89
    %s92 = sphi 0, %s91
    %s106 = sphi 0, %s92
    %s110 = sphi 0, %s110
    %s112 = sphi 0, %s110
    %s113 = sphi 0, %s112
    %s127 = sphi 0, %s113
    %s131 = sphi 0, %s131
    %s133 = sphi 0, %s131
    %s134 = sphi 0, %s133
    %s148 = sphi 0, %s134
    %s152 = sphi 0, %s152
    %s154 = sphi 0, %s152
    %s155 = sphi 0, %s154
    %s169 = sphi 0, %s155
    %s175 = sphi 0, %s177
    %s178 = sphi 0, %s175
    %s179 = sphi 0, %s178
    %s195 = sphi 0, %s179
  $region4: #{decoder_forward.1} parent=0 // loop_header_branch
    %16 = sbr.rel (%p14) target = $region8
  $region5: #{decoder_forward.1} parent=0 // loop_body
    %s18 = ssub.s32 %s13, 1
    %s19 = ssub.s32 %s13, 2
    %s20 = sadd.s32 %s13, 1
    %s21 = ssub.s32 %s13, %s20
    %p22 = scmp.eq.s32.totalorder %s21, 0
    %s24 = sadd.s32 %s23, 1
    %s25 = scalar_select %p22, %s23, %s24
    %p28 = pneg %p22
    %p29 = scmp.eq.s32.totalorder %s13, 3
    %p30 = por %p28, %p29
    %p31 = scmp.ne.s32.totalorder %s23, %s26
    %p32 = scmp.eq.s32.totalorder %s13, 0
    %p33 = por %p31, %p32
    %p34 = scmp.ne.s32.totalorder %s23, %s26
    %p35 = scmp.eq.s32.totalorder %s18, 3
    %p36 = por %p34, %p35
    %p37 = scmp.ne.s32.totalorder %s26, %s27
    %p38 = scmp.eq.s32.totalorder %s18, 0
    %p39 = por %p37, %p38
    %p40 = scmp.ne.s32.totalorder %s26, %s27
    %p41 = scmp.eq.s32.totalorder %s19, 3
    %p42 = por %p40, %p41
    %p44 = scmp.ne.s32.totalorder %s27, %s43
    %p45 = scmp.eq.s32.totalorder %s19, 0
    %p46 = por %p44, %p45
    %s48 = sadd.s32 %s47, 1
    %p51 = scmp.eq.s32.totalorder %s13, 3
    %p52 = scmp.ne.s32.totalorder %s47, %s49
    %p53 = scmp.eq.s32.totalorder %s13, 0
    %p54 = por %p52, %p53
    %p55 = scmp.ne.s32.totalorder %s47, %s49
    %p56 = scmp.eq.s32.totalorder %s18, 3
    %p57 = por %p55, %p56
    %p58 = scmp.ne.s32.totalorder %s49, %s50
    %p59 = scmp.eq.s32.totalorder %s18, 0
    %p60 = por %p58, %p59
    %p61 = scmp.ne.s32.totalorder %s49, %s50
    %p62 = scmp.eq.s32.totalorder %s19, 3
    %p63 = por %p61, %p62
    %p65 = scmp.ne.s32.totalorder %s50, %s64
    %p66 = scmp.eq.s32.totalorder %s19, 0
    %p67 = por %p65, %p66
    %s69 = sadd.s32 %s68, 1
    %p72 = scmp.eq.s32.totalorder %s13, 3
    %p73 = scmp.ne.s32.totalorder %s68, %s70
    %p74 = scmp.eq.s32.totalorder %s13, 0
    %p75 = por %p73, %p74
    %p76 = scmp.ne.s32.totalorder %s68, %s70
    %p77 = scmp.eq.s32.totalorder %s18, 3
    %p78 = por %p76, %p77
    %p79 = scmp.ne.s32.totalorder %s70, %s71
    %p80 = scmp.eq.s32.totalorder %s18, 0
    %p81 = por %p79, %p80
    %p82 = scmp.ne.s32.totalorder %s70, %s71
    %p83 = scmp.eq.s32.totalorder %s19, 3
    %p84 = por %p82, %p83
    %p86 = scmp.ne.s32.totalorder %s71, %s85
    %p87 = scmp.eq.s32.totalorder %s19, 0
    %p88 = por %p86, %p87
    %s90 = sadd.s32 %s89, 1
    %p93 = scmp.eq.s32.totalorder %s13, 3
    %p94 = scmp.ne.s32.totalorder %s89, %s91
    %p95 = scmp.eq.s32.totalorder %s13, 0
    %p96 = por %p94, %p95
    %p97 = scmp.ne.s32.totalorder %s89, %s91
    %p98 = scmp.eq.s32.totalorder %s18, 3
    %p99 = por %p97, %p98
    %p100 = scmp.ne.s32.totalorder %s91, %s92
    %p101 = scmp.eq.s32.totalorder %s18, 0
    %p102 = por %p100, %p101
    %p103 = scmp.ne.s32.totalorder %s91, %s92
    %p104 = scmp.eq.s32.totalorder %s19, 3
    %p105 = por %p103, %p104
    %p107 = scmp.ne.s32.totalorder %s92, %s106
    %p108 = scmp.eq.s32.totalorder %s19, 0
    %p109 = por %p107, %p108
    %s111 = sadd.s32 %s110, 1
    %p114 = scmp.eq.s32.totalorder %s13, 3
    %p115 = scmp.ne.s32.totalorder %s110, %s112
    %p116 = scmp.eq.s32.totalorder %s13, 0
    %p117 = por %p115, %p116
    %p118 = scmp.ne.s32.totalorder %s110, %s112
    %p119 = scmp.eq.s32.totalorder %s18, 3
    %p120 = por %p118, %p119
    %p121 = scmp.ne.s32.totalorder %s112, %s113
    %p122 = scmp.eq.s32.totalorder %s18, 0
    %p123 = por %p121, %p122
    %p124 = scmp.ne.s32.totalorder %s112, %s113
    %p125 = scmp.eq.s32.totalorder %s19, 3
    %p126 = por %p124, %p125
    %p128 = scmp.ne.s32.totalorder %s113, %s127
    %p129 = scmp.eq.s32.totalorder %s19, 0
    %p130 = por %p128, %p129
    %s132 = sadd.s32 %s131, 1
    %p135 = scmp.eq.s32.totalorder %s13, 3
    %p136 = scmp.ne.s32.totalorder %s131, %s133
    %p137 = scmp.eq.s32.totalorder %s13, 0
    %p138 = por %p136, %p137
    %p139 = scmp.ne.s32.totalorder %s131, %s133
    %p140 = scmp.eq.s32.totalorder %s18, 3
    %p141 = por %p139, %p140
    %p142 = scmp.ne.s32.totalorder %s133, %s134
    %p143 = scmp.eq.s32.totalorder %s18, 0
    %p144 = por %p142, %p143
    %p145 = scmp.ne.s32.totalorder %s133, %s134
    %p146 = scmp.eq.s32.totalorder %s19, 3
    %p147 = por %p145, %p146
    %p149 = scmp.ne.s32.totalorder %s134, %s148
    %p150 = scmp.eq.s32.totalorder %s19, 0
    %p151 = por %p149, %p150
    %s153 = sadd.s32 %s152, 1
    %p156 = scmp.eq.s32.totalorder %s13, 3
    %p157 = scmp.ne.s32.totalorder %s152, %s154
    %p158 = scmp.eq.s32.totalorder %s13, 0
    %p159 = por %p157, %p158
    %p160 = scmp.ne.s32.totalorder %s152, %s154
    %p161 = scmp.eq.s32.totalorder %s18, 3
    %p162 = por %p160, %p161
    %p163 = scmp.ne.s32.totalorder %s154, %s155
    %p164 = scmp.eq.s32.totalorder %s18, 0
    %p165 = por %p163, %p164
    %p166 = scmp.ne.s32.totalorder %s154, %s155
    %p167 = scmp.eq.s32.totalorder %s19, 3
    %p168 = por %p166, %p167
    %p170 = scmp.ne.s32.totalorder %s155, %s169
    %p171 = scmp.eq.s32.totalorder %s19, 0
    %p172 = por %p170, %p171
    %s173 = ssub.s32 %s13, %s20
    %p174 = scmp.eq.s32.totalorder %s173, 0
    %s176 = sadd.s32 %s175, 1
    %s177 = scalar_select %p174, %s175, %s176
    %p180 = pneg %p174
    %p181 = scmp.eq.s32.totalorder %s13, 3
    %p182 = por %p180, %p181
    %p183 = scmp.ne.s32.totalorder %s175, %s178
    %p184 = scmp.eq.s32.totalorder %s13, 0
    %p185 = por %p183, %p184
    %p186 = scmp.ne.s32.totalorder %s175, %s178
    %p187 = scmp.eq.s32.totalorder %s18, 3
    %p188 = por %p186, %p187
    %p189 = scmp.ne.s32.totalorder %s178, %s179
    %p190 = scmp.eq.s32.totalorder %s18, 0
    %p191 = por %p189, %p190
    %p192 = scmp.ne.s32.totalorder %s178, %s179
    %p193 = scmp.eq.s32.totalorder %s19, 3
    %p194 = por %p192, %p193
    %p196 = scmp.ne.s32.totalorder %s179, %s195
    %p197 = scmp.eq.s32.totalorder %s19, 0
    %p198 = por %p196, %p197
    %p199 = scmp.le.s32.totalorder 1, %s13
    %p200 = scmp.lt.s32.totalorder %s13, 5
    %p201 = pnand %p199, %p200
    %p202 = pneg %p201
    // Predicated region
    $region9: #{decoder_forward.1} parent=5 // pred_check
      _
    $region10: #{decoder_forward.1} parent=5 // pred_check_branch
      %204 = sbr.rel (%p201) target = $region12
    $region11: #{decoder_forward.1} parent=5 // pred_region
      %s205 = ssub.s32 %s13, 1
      // Predicated region
      $region13: #{decoder_forward.1} parent=11 // pred_check
        %p206 = pneg %p60
      $region14: #{decoder_forward.1} parent=11 // pred_check_branch
        %208 = sbr.rel (%p206) target = $region16
      $region15: #{decoder_forward.1} parent=11 // pred_region
        _
      $region16: #{decoder_forward.1} parent=11 // pred_fallthru
        _
      // Predicated region
      $region17: #{decoder_forward.1} parent=11 // pred_check
        %p209 = pneg %p81
      $region18: #{decoder_forward.1} parent=11 // pred_check_branch
        %211 = sbr.rel (%p209) target = $region20
      $region19: #{decoder_forward.1} parent=11 // pred_region
        _
      $region20: #{decoder_forward.1} parent=11 // pred_fallthru
        _
      // Predicated region
      $region21: #{decoder_forward.1} parent=11 // pred_check
        %p212 = pneg %p102
      $region22: #{decoder_forward.1} parent=11 // pred_check_branch
        %214 = sbr.rel (%p212) target = $region24
      $region23: #{decoder_forward.1} parent=11 // pred_region
        _
      $region24: #{decoder_forward.1} parent=11 // pred_fallthru
        _
      // Predicated region
      $region25: #{decoder_forward.1} parent=11 // pred_check
        %p215 = pneg %p123
      $region26: #{decoder_forward.1} parent=11 // pred_check_branch
        %217 = sbr.rel (%p215) target = $region28
      $region27: #{decoder_forward.1} parent=11 // pred_region
        _
      $region28: #{decoder_forward.1} parent=11 // pred_fallthru
        _
      // Predicated region
      $region29: #{decoder_forward.1} parent=11 // pred_check
        %p218 = pneg %p144
      $region30: #{decoder_forward.1} parent=11 // pred_check_branch
        %220 = sbr.rel (%p218) target = $region32
      $region31: #{decoder_forward.1} parent=11 // pred_region
        _
      $region32: #{decoder_forward.1} parent=11 // pred_fallthru
        _
      // Predicated region
      $region33: #{decoder_forward.1} parent=11 // pred_check
        %p221 = pneg %p165
      $region34: #{decoder_forward.1} parent=11 // pred_check_branch
        %223 = sbr.rel (%p221) target = $region36
      $region35: #{decoder_forward.1} parent=11 // pred_region
        _
      $region36: #{decoder_forward.1} parent=11 // pred_fallthru
        _
    $region12: #{decoder_forward.1} parent=5 // pred_fallthru
      _
    %p224 = scmp.lt.s32.totalorder %s13, 4
    // Predicated region
    $region37: #{decoder_forward.1} parent=5 // pred_check
      %p225 = pneg %p224
    $region38: #{decoder_forward.1} parent=5 // pred_check_branch
      %227 = sbr.rel (%p225) target = $region40
    $region39: #{decoder_forward.1} parent=5 // pred_region
      // Predicated region
      $region41: #{decoder_forward.1} parent=39 // pred_check
        %p228 = pneg %p33
      $region42: #{decoder_forward.1} parent=39 // pred_check_branch
        %230 = sbr.rel (%p228) target = $region44
      $region43: #{decoder_forward.1} parent=39 // pred_region
        %s231 = smul.u32 8, %s13
        %p232 = scmp.lt.s32.totalorder %s231, 31
        %s233 = scalar_select %p232, %s231, 31
        %s234 = smul.addr %s233, 4
        %s235 = scalar_lea.vmem %s0, %s234
        %s236 = smul.u32 8, %s13
      $region44: #{decoder_forward.1} parent=39 // pred_fallthru
        _
    $region40: #{decoder_forward.1} parent=5 // pred_fallthru
      _
    %p237 = scmp.le.s32.totalorder 1, %s13
    %p238 = scmp.lt.s32.totalorder %s13, 5
    %p239 = pnand %p237, %p238
    %p240 = pneg %p239
    // Predicated region
    $region45: #{decoder_forward.1} parent=5 // pred_check
      _
    $region46: #{decoder_forward.1} parent=5 // pred_check_branch
      %242 = sbr.rel (%p239) target = $region48
    $region47: #{decoder_forward.1} parent=5 // pred_region
      %s243 = ssub.s32 %s13, 1
      %s244 = smul.u32 8, %s18
      %p245 = scmp.lt.s32.totalorder %s244, 31
      %s246 = scalar_select %p245, %s244, 31
      %s247 = smul.addr %s246, 4
      %s248 = scalar_lea.vmem %s0, %s247
      %p249 = pneg %p39
      %p250 = pneg %p36
      %p251 = pneg %p60
      %p252 = pneg %p57
      %p253 = pneg %p81
      %p254 = pneg %p78
      %p255 = pneg %p102
      %p256 = pneg %p99
      %p257 = pneg %p123
      %p258 = pneg %p120
      %p259 = pneg %p144
      %p260 = pneg %p141
      %p261 = pneg %p165
      %p262 = pneg %p162
      %p263 = pneg %p191
      %p264 = pneg %p188
      %s265 = smul.u32 8, %s18
      %p266 = scmp.lt.s32.totalorder %s265, 31
      %s267 = scalar_select %p266, %s265, 31
      %s268 = smul.addr %s267, 8
      %s269 = scalar_lea.vmem %s7, %s268
      %s270 = smul.u32 8, %s18
      %p271 = scmp.lt.s32.totalorder %s270, 31
      %s272 = scalar_select %p271, %s270, 31
      %s273 = smul.addr %s272, 4
      %s274 = scalar_lea.vmem %s0, %s273
      %s275 = smul.u32 8, %s18
      %s276 = smul.u32 8, %s18
      %p277 = scmp.lt.s32.totalorder %s276, 31
      %s278 = scalar_select %p277, %s276, 31
      %s279 = smul.addr %s278, 8
      %s280 = scalar_lea.vmem %s7, %s279
      %s281 = smul.u32 8, %s18
      %v283 = vld [vmem:[%s274] sm:$0xf]
      %v284 = vld [vmem:[%s274 + $0x4] sm:$0xf]
      %v285 = vld [vmem:[%s274 + $0x8] sm:$0xf]
      %v286 = vld [vmem:[%s274 + $0xc] sm:$0xf]
      %v287 = vld [vmem:[%s274 + $0x10] sm:$0xf]
      %v288 = vld [vmem:[%s274 + $0x14] sm:$0xf]
      %v289 = vld [vmem:[%s274 + $0x18] sm:$0xf]
      %v290 = vld [vmem:[%s274 + $0x1c] sm:$0xf]
      %v291 = vld [vmem:[%s1] sm:$0xf]
      %v292 = vld [vmem:[%s1 + $0x4] sm:$0xf]
      %v293 = vld [vmem:[%s1 + $0x8] sm:$0xf]
      %v294 = vld [vmem:[%s1 + $0xc] sm:$0xf]
      %v295 = vld [vmem:[%s1 + $0x10] sm:$0xf]
      %v296 = vld [vmem:[%s1 + $0x14] sm:$0xf]
      %v297 = vld [vmem:[%s1 + $0x18] sm:$0xf]
      %v298 = vld [vmem:[%s1 + $0x1c] sm:$0xf]
      %v299 = vld [vmem:[%s1 + $0x20] sm:$0xf]
      %v300 = vld [vmem:[%s1 + $0x24] sm:$0xf]
      %v301 = vld [vmem:[%s1 + $0x28] sm:$0xf]
      %v302 = vld [vmem:[%s1 + $0x2c] sm:$0xf]
      %v303 = vld [vmem:[%s1 + $0x30] sm:$0xf]
      %v304 = vld [vmem:[%s1 + $0x34] sm:$0xf]
      %v305 = vld [vmem:[%s1 + $0x38] sm:$0xf]
      %v306 = vld [vmem:[%s1 + $0x3c] sm:$0xf]
      %v307 = vld [vmem:[%s2] sm:$0x1]
      %v309 = vlaneseq
      %v310 = vshrl.u32 %v309, 7
      %v311 = vsub.s32 0, %v310
      %v312 = vrot.slane %v307, %v311
      %v322 = vunpack.c.l.b16 %v283
      %v323 = vunpack.c.l.b16 %v284
      %v324 = vunpack.c.l.b16 %v285
      %v325 = vunpack.c.l.b16 %v286
      %v326 = vunpack.c.l.b16 %v287
      %v327 = vunpack.c.l.b16 %v288
      %v328 = vunpack.c.l.b16 %v289
      %v329 = vunpack.c.l.b16 %v290
      %v330 = vpack.c.b16 %v323, %v322
      %v331 = vpack.c.b16 %v325, %v324
      %v332 = vpack.c.b16 %v327, %v326
      %v333 = vpack.c.b16 %v329, %v328
      %v354 = vunpack.c.l.b16 %v291
      %v355 = vunpack.c.l.b16 %v292
      %v356 = vunpack.c.l.b16 %v293
      %v357 = vunpack.c.l.b16 %v294
      %v358 = vunpack.c.l.b16 %v295
      %v359 = vunpack.c.l.b16 %v296
      %v360 = vunpack.c.l.b16 %v297
      %v361 = vunpack.c.l.b16 %v298
      %v362 = vunpack.c.l.b16 %v299
      %v363 = vunpack.c.l.b16 %v300
      %v364 = vunpack.c.l.b16 %v301
      %v365 = vunpack.c.l.b16 %v302
      %v366 = vunpack.c.l.b16 %v303
      %v367 = vunpack.c.l.b16 %v304
      %v368 = vunpack.c.l.b16 %v305
      %v369 = vunpack.c.l.b16 %v306
      %v370 = vpack.c.b16 %v355, %v354
      %v371 = vpack.c.b16 %v357, %v356
      %v372 = vpack.c.b16 %v359, %v358
      %v373 = vpack.c.b16 %v361, %v360
      %v374 = vpack.c.b16 %v363, %v362
      %v375 = vpack.c.b16 %v365, %v364
      %v376 = vpack.c.b16 %v367, %v366
      %v377 = vpack.c.b16 %v369, %v368
      %386 = vmatprep.subr.bf16.mxu0 0
      %387 = vmatpush1.bf16.msra.mxu0 %v377
      %388 = vmatprep.subr.bf16.mxu0 0
      %389 = vmatpush1.bf16.msra.mxu0 %v376
      %390 = vmatprep.subr.bf16.mxu0 0
      %391 = vmatpush1.bf16.msra.mxu0 %v375
      %392 = vmatprep.subr.bf16.mxu0 0
      %393 = vmatpush1.bf16.msra.mxu0 %v374
      %394 = vmatprep.subr.bf16.mxu0 0
      %395 = vmatpush1.bf16.msra.mxu0 %v373
      %396 = vmatprep.subr.bf16.mxu0 0
      %397 = vmatpush1.bf16.msra.mxu0 %v372
      %398 = vmatprep.subr.bf16.mxu0 0
      %399 = vmatpush1.bf16.msra.mxu0 %v371
      %400 = vmatprep.subr.bf16.mxu0 0
      %401 = vmatpush1.bf16.msra.mxu0 %v370
      %402 = vmatprep.subr.bf16.mxu0 0
      %403 = vmatpush2.bf16.msra.mxu0 0
      %404 = vmatprep.subr.bf16.mxu0 0
      %405 = vmatpush2.bf16.msra.mxu0 0
      %406 = vmatprep.subr.bf16.mxu0 0
      %407 = vmatpush2.bf16.msra.mxu0 0
      %408 = vmatprep.subr.bf16.mxu0 0
      %409 = vmatpush2.bf16.msra.mxu0 0
      %410 = vmatprep.subr.bf16.mxu0 0
      %411 = vmatpush2.bf16.msra.mxu0 0
      %412 = vmatprep.subr.bf16.mxu0 0
      %413 = vmatpush2.bf16.msra.mxu0 0
      %414 = vmatprep.subr.bf16.mxu0 0
      %415 = vmatpush2.bf16.msra.mxu0 0
      %416 = vmatprep.subr.bf16.mxu0 0
      %417 = vmatpush2.bf16.msra.mxu0 0
      %418 = vmatprep.mubr.bf16.mxu0 0
      %419 = vmatmul.mubr.bf16.gmra.mxu0 %v330
      %v420 = vpop.f32.mrf.mxu0
      %v421 = vadd.f32 %v312, %v420
      %v422 = vpop.f32.mrf.mxu0
      %v423 = vpop.f32.mrf.mxu0
      %v424 = vadd.f32 %v312, %v423
      %v425 = vpop.f32.mrf.mxu0
      %426 = vmatprep.mubr.bf16.mxu0 0
      %427 = vmatmul.mubr.bf16.gmra.mxu0 %v331
      %v428 = vpop.f32.mrf.mxu0
      %v429 = vadd.f32 %v312, %v428
      %v430 = vpop.f32.mrf.mxu0
      %v431 = vpop.f32.mrf.mxu0
      %v432 = vadd.f32 %v312, %v431
      %v433 = vpop.f32.mrf.mxu0
      %434 = vmatprep.mubr.bf16.mxu0 0
      %435 = vmatmul.mubr.bf16.gmra.mxu0 %v332
      %v436 = vpop.f32.mrf.mxu0
      %v437 = vadd.f32 %v312, %v436
      %v438 = vpop.f32.mrf.mxu0
      %v439 = vpop.f32.mrf.mxu0
      %v440 = vadd.f32 %v312, %v439
      %v441 = vpop.f32.mrf.mxu0
      %442 = vmatprep.mubr.bf16.mxu0 0
      %443 = vmatmul.mubr.bf16.gmra.mxu0 %v333
      %v444 = vpop.f32.mrf.mxu0
      %v445 = vadd.f32 %v312, %v444
      %v446 = vpop.f32.mrf.mxu0
      %v447 = vpop.f32.mrf.mxu0
      %v448 = vadd.f32 %v312, %v447
      %v449 = vpop.f32.mrf.mxu0
      %450 = vdwg.mxu0
      %vm451 = vcmp.gt.f32.partialorder %v421, 0.0
      %vm452 = vcmp.gt.f32.partialorder %v424, 0.0
      %vm453 = vcmp.gt.f32.partialorder %v429, 0.0
      %vm454 = vcmp.gt.f32.partialorder %v432, 0.0
      %vm455 = vcmp.gt.f32.partialorder %v437, 0.0
      %vm456 = vcmp.gt.f32.partialorder %v440, 0.0
      %vm457 = vcmp.gt.f32.partialorder %v445, 0.0
      %vm458 = vcmp.gt.f32.partialorder %v448, 0.0
      %v459 = vmul.f32 %v421, 0.2
      %v460 = vmul.f32 %v424, 0.2
      %v461 = vmul.f32 %v429, 0.2
      %v462 = vmul.f32 %v432, 0.2
      %v463 = vmul.f32 %v437, 0.2
      %v464 = vmul.f32 %v440, 0.2
      %v465 = vmul.f32 %v445, 0.2
      %v466 = vmul.f32 %v448, 0.2
      %v467 = vsel %vm451, %v421, %v459
      %v468 = vsel %vm452, %v424, %v460
      %v469 = vsel %vm453, %v429, %v461
      %v470 = vsel %vm454, %v432, %v462
      %v471 = vsel %vm455, %v437, %v463
      %v472 = vsel %vm456, %v440, %v464
      %v473 = vsel %vm457, %v445, %v465
      %v474 = vsel %vm458, %v448, %v466
      %v475 = vpack.c.bf16 %v468, %v467
      %v476 = vpack.c.bf16 %v470, %v469
      %v477 = vpack.c.bf16 %v472, %v471
      %v478 = vpack.c.bf16 %v474, %v473
      %v479 = vld [vmem:[%s3] sm:$0xf]
      %v480 = vld [vmem:[%s3 + $0x4] sm:$0xf]
      %v481 = vld [vmem:[%s3 + $0x8] sm:$0xf]
      %v482 = vld [vmem:[%s3 + $0xc] sm:$0xf]
      %v483 = vld [vmem:[%s3 + $0x10] sm:$0xf]
      %v484 = vld [vmem:[%s3 + $0x14] sm:$0xf]
      %v485 = vld [vmem:[%s3 + $0x18] sm:$0xf]
      %v486 = vld [vmem:[%s3 + $0x1c] sm:$0xf]
      %v487 = vld [vmem:[%s3 + $0x20] sm:$0xf]
      %v488 = vld [vmem:[%s3 + $0x24] sm:$0xf]
      %v489 = vld [vmem:[%s3 + $0x28] sm:$0xf]
      %v490 = vld [vmem:[%s3 + $0x2c] sm:$0xf]
      %v491 = vld [vmem:[%s3 + $0x30] sm:$0xf]
      %v492 = vld [vmem:[%s3 + $0x34] sm:$0xf]
      %v493 = vld [vmem:[%s3 + $0x38] sm:$0xf]
      %v494 = vld [vmem:[%s3 + $0x3c] sm:$0xf]
      %v495 = vld [vmem:[%s4] sm:$0x1]
      %v497 = vlaneseq
      %v498 = vshrl.u32 %v497, 7
      %v499 = vsub.s32 0, %v498
      %v500 = vrot.slane %v495, %v499
      %v518 = vunpack.c.l.b16 %v479
      %v519 = vunpack.c.l.b16 %v480
      %v520 = vunpack.c.l.b16 %v481
      %v521 = vunpack.c.l.b16 %v482
      %v522 = vunpack.c.l.b16 %v483
      %v523 = vunpack.c.l.b16 %v484
      %v524 = vunpack.c.l.b16 %v485
      %v525 = vunpack.c.l.b16 %v486
      %v526 = vunpack.c.l.b16 %v487
      %v527 = vunpack.c.l.b16 %v488
      %v528 = vunpack.c.l.b16 %v489
      %v529 = vunpack.c.l.b16 %v490
      %v530 = vunpack.c.l.b16 %v491
      %v531 = vunpack.c.l.b16 %v492
      %v532 = vunpack.c.l.b16 %v493
      %v533 = vunpack.c.l.b16 %v494
      %v534 = vpack.c.b16 %v519, %v518
      %v535 = vpack.c.b16 %v521, %v520
      %v536 = vpack.c.b16 %v523, %v522
      %v537 = vpack.c.b16 %v525, %v524
      %v538 = vpack.c.b16 %v527, %v526
      %v539 = vpack.c.b16 %v529, %v528
      %v540 = vpack.c.b16 %v531, %v530
      %v541 = vpack.c.b16 %v533, %v532
      %550 = vmatprep.subr.bf16.mxu0 0
      %551 = vmatpush1.bf16.msra.mxu0 %v541
      %552 = vmatprep.subr.bf16.mxu0 0
      %553 = vmatpush1.bf16.msra.mxu0 %v540
      %554 = vmatprep.subr.bf16.mxu0 0
      %555 = vmatpush1.bf16.msra.mxu0 %v539
      %556 = vmatprep.subr.bf16.mxu0 0
      %557 = vmatpush1.bf16.msra.mxu0 %v538
      %558 = vmatprep.subr.bf16.mxu0 0
      %559 = vmatpush1.bf16.msra.mxu0 %v537
      %560 = vmatprep.subr.bf16.mxu0 0
      %561 = vmatpush1.bf16.msra.mxu0 %v536
      %562 = vmatprep.subr.bf16.mxu0 0
      %563 = vmatpush1.bf16.msra.mxu0 %v535
      %564 = vmatprep.subr.bf16.mxu0 0
      %565 = vmatpush1.bf16.msra.mxu0 %v534
      %566 = vmatprep.subr.bf16.mxu0 0
      %567 = vmatpush2.bf16.msra.mxu0 0
      %568 = vmatprep.subr.bf16.mxu0 0
      %569 = vmatpush2.bf16.msra.mxu0 0
      %570 = vmatprep.subr.bf16.mxu0 0
      %571 = vmatpush2.bf16.msra.mxu0 0
      %572 = vmatprep.subr.bf16.mxu0 0
      %573 = vmatpush2.bf16.msra.mxu0 0
      %574 = vmatprep.subr.bf16.mxu0 0
      %575 = vmatpush2.bf16.msra.mxu0 0
      %576 = vmatprep.subr.bf16.mxu0 0
      %577 = vmatpush2.bf16.msra.mxu0 0
      %578 = vmatprep.subr.bf16.mxu0 0
      %579 = vmatpush2.bf16.msra.mxu0 0
      %580 = vmatprep.subr.bf16.mxu0 0
      %581 = vmatpush2.bf16.msra.mxu0 0
      %582 = vmatprep.mubr.bf16.mxu0 0
      %583 = vmatmul.mubr.bf16.gmra.mxu0 %v475
      %v584 = vpop.f32.mrf.mxu0
      %v585 = vadd.f32 %v500, %v584
      %v586 = vpop.f32.mrf.mxu0
      %v587 = vpop.f32.mrf.mxu0
      %v588 = vadd.f32 %v500, %v587
      %v589 = vpop.f32.mrf.mxu0
      %590 = vmatprep.mubr.bf16.mxu0 0
      %591 = vmatmul.mubr.bf16.gmra.mxu0 %v476
      %v592 = vpop.f32.mrf.mxu0
      %v593 = vadd.f32 %v500, %v592
      %v594 = vpop.f32.mrf.mxu0
      %v595 = vpop.f32.mrf.mxu0
      %v596 = vadd.f32 %v500, %v595
      %v597 = vpop.f32.mrf.mxu0
      %598 = vmatprep.mubr.bf16.mxu0 0
      %599 = vmatmul.mubr.bf16.gmra.mxu0 %v477
      %v600 = vpop.f32.mrf.mxu0
      %v601 = vadd.f32 %v500, %v600
      %v602 = vpop.f32.mrf.mxu0
      %v603 = vpop.f32.mrf.mxu0
      %v604 = vadd.f32 %v500, %v603
      %v605 = vpop.f32.mrf.mxu0
      %606 = vmatprep.mubr.bf16.mxu0 0
      %607 = vmatmul.mubr.bf16.gmra.mxu0 %v478
      %v608 = vpop.f32.mrf.mxu0
      %v609 = vadd.f32 %v500, %v608
      %v610 = vpop.f32.mrf.mxu0
      %v611 = vpop.f32.mrf.mxu0
      %v612 = vadd.f32 %v500, %v611
      %v613 = vpop.f32.mrf.mxu0
      %614 = vdwg.mxu0
      %vm615 = vcmp.gt.f32.partialorder %v585, 0.0
      %vm616 = vcmp.gt.f32.partialorder %v588, 0.0
      %vm617 = vcmp.gt.f32.partialorder %v593, 0.0
      %vm618 = vcmp.gt.f32.partialorder %v596, 0.0
      %vm619 = vcmp.gt.f32.partialorder %v601, 0.0
      %vm620 = vcmp.gt.f32.partialorder %v604, 0.0
      %vm621 = vcmp.gt.f32.partialorder %v609, 0.0
      %vm622 = vcmp.gt.f32.partialorder %v612, 0.0
      %v623 = vmul.f32 %v585, 0.2
      %v624 = vmul.f32 %v588, 0.2
      %v625 = vmul.f32 %v593, 0.2
      %v626 = vmul.f32 %v596, 0.2
      %v627 = vmul.f32 %v601, 0.2
      %v628 = vmul.f32 %v604, 0.2
      %v629 = vmul.f32 %v609, 0.2
      %v630 = vmul.f32 %v612, 0.2
      %v631 = vsel %vm615, %v585, %v623
      %v632 = vsel %vm616, %v588, %v624
      %v633 = vsel %vm617, %v593, %v625
      %v634 = vsel %vm618, %v596, %v626
      %v635 = vsel %vm619, %v601, %v627
      %v636 = vsel %vm620, %v604, %v628
      %v637 = vsel %vm621, %v609, %v629
      %v638 = vsel %vm622, %v612, %v630
      %v639 = vpack.c.bf16 %v632, %v631
      %v640 = vpack.c.bf16 %v634, %v633
      %v641 = vpack.c.bf16 %v636, %v635
      %v642 = vpack.c.bf16 %v638, %v637
      %v643 = vld [vmem:[%s5] sm:$0xf]
      %v644 = vld [vmem:[%s5 + $0x4] sm:$0xf]
      %v645 = vld [vmem:[%s5 + $0x8] sm:$0xf]
      %v646 = vld [vmem:[%s5 + $0xc] sm:$0xf]
      %v647 = vld [vmem:[%s5 + $0x10] sm:$0xf]
      %v648 = vld [vmem:[%s5 + $0x14] sm:$0xf]
      %v649 = vld [vmem:[%s5 + $0x18] sm:$0xf]
      %v650 = vld [vmem:[%s5 + $0x1c] sm:$0xf]
      %v651 = vld [vmem:[%s5 + $0x20] sm:$0xf]
      %v652 = vld [vmem:[%s5 + $0x24] sm:$0xf]
      %v653 = vld [vmem:[%s5 + $0x28] sm:$0xf]
      %v654 = vld [vmem:[%s5 + $0x2c] sm:$0xf]
      %v655 = vld [vmem:[%s5 + $0x30] sm:$0xf]
      %v656 = vld [vmem:[%s5 + $0x34] sm:$0xf]
      %v657 = vld [vmem:[%s5 + $0x38] sm:$0xf]
      %v658 = vld [vmem:[%s5 + $0x3c] sm:$0xf]
      %v659 = vld [vmem:[%s6] sm:$0x1]
      %v661 = vlaneseq
      %v662 = vshrl.u32 %v661, 7
      %v663 = vsub.s32 0, %v662
      %v664 = vrot.slane %v659, %v663
      %v682 = vunpack.c.l.b16 %v643
      %v683 = vunpack.c.l.b16 %v644
      %v684 = vunpack.c.l.b16 %v645
      %v685 = vunpack.c.l.b16 %v646
      %v686 = vunpack.c.l.b16 %v647
      %v687 = vunpack.c.l.b16 %v648
      %v688 = vunpack.c.l.b16 %v649
      %v689 = vunpack.c.l.b16 %v650
      %v690 = vunpack.c.l.b16 %v651
      %v691 = vunpack.c.l.b16 %v652
      %v692 = vunpack.c.l.b16 %v653
      %v693 = vunpack.c.l.b16 %v654
      %v694 = vunpack.c.l.b16 %v655
      %v695 = vunpack.c.l.b16 %v656
      %v696 = vunpack.c.l.b16 %v657
      %v697 = vunpack.c.l.b16 %v658
      %v698 = vpack.c.b16 %v683, %v682
      %v699 = vpack.c.b16 %v685, %v684
      %v700 = vpack.c.b16 %v687, %v686
      %v701 = vpack.c.b16 %v689, %v688
      %v702 = vpack.c.b16 %v691, %v690
      %v703 = vpack.c.b16 %v693, %v692
      %v704 = vpack.c.b16 %v695, %v694
      %v705 = vpack.c.b16 %v697, %v696
      %714 = vmatprep.subr.bf16.mxu0 0
      %715 = vmatpush1.bf16.msra.mxu0 %v705
      %716 = vmatprep.subr.bf16.mxu0 0
      %717 = vmatpush1.bf16.msra.mxu0 %v704
      %718 = vmatprep.subr.bf16.mxu0 0
      %719 = vmatpush1.bf16.msra.mxu0 %v703
      %720 = vmatprep.subr.bf16.mxu0 0
      %721 = vmatpush1.bf16.msra.mxu0 %v702
      %722 = vmatprep.subr.bf16.mxu0 0
      %723 = vmatpush1.bf16.msra.mxu0 %v701
      %724 = vmatprep.subr.bf16.mxu0 0
      %725 = vmatpush1.bf16.msra.mxu0 %v700
      %726 = vmatprep.subr.bf16.mxu0 0
      %727 = vmatpush1.bf16.msra.mxu0 %v699
      %728 = vmatprep.subr.bf16.mxu0 0
      %729 = vmatpush1.bf16.msra.mxu0 %v698
      %730 = vmatprep.subr.bf16.mxu0 0
      %731 = vmatpush2.bf16.msra.mxu0 0
      %732 = vmatprep.subr.bf16.mxu0 0
      %733 = vmatpush2.bf16.msra.mxu0 0
      %734 = vmatprep.subr.bf16.mxu0 0
      %735 = vmatpush2.bf16.msra.mxu0 0
      %736 = vmatprep.subr.bf16.mxu0 0
      %737 = vmatpush2.bf16.msra.mxu0 0
      %738 = vmatprep.subr.bf16.mxu0 0
      %739 = vmatpush2.bf16.msra.mxu0 0
      %740 = vmatprep.subr.bf16.mxu0 0
      %741 = vmatpush2.bf16.msra.mxu0 0
      %742 = vmatprep.subr.bf16.mxu0 0
      %743 = vmatpush2.bf16.msra.mxu0 0
      %744 = vmatprep.subr.bf16.mxu0 0
      %745 = vmatpush2.bf16.msra.mxu0 0
      %746 = vmatprep.mubr.bf16.mxu0 0
      %747 = vmatmul.mubr.bf16.gmra.mxu0 %v639
      %v748 = vpop.f32.mrf.mxu0
      %v749 = vadd.f32 %v664, %v748
      %v750 = vpop.f32.mrf.mxu0
      %v751 = vpop.f32.mrf.mxu0
      %v752 = vadd.f32 %v664, %v751
      %v753 = vpop.f32.mrf.mxu0
      %754 = vmatprep.mubr.bf16.mxu0 0
      %755 = vmatmul.mubr.bf16.gmra.mxu0 %v640
      %v756 = vpop.f32.mrf.mxu0
      %v757 = vadd.f32 %v664, %v756
      %v758 = vpop.f32.mrf.mxu0
      %v759 = vpop.f32.mrf.mxu0
      %v760 = vadd.f32 %v664, %v759
      %v761 = vpop.f32.mrf.mxu0
      %762 = vmatprep.mubr.bf16.mxu0 0
      %763 = vmatmul.mubr.bf16.gmra.mxu0 %v641
      %v764 = vpop.f32.mrf.mxu0
      %v765 = vadd.f32 %v664, %v764
      %v766 = vpop.f32.mrf.mxu0
      %v767 = vpop.f32.mrf.mxu0
      %v768 = vadd.f32 %v664, %v767
      %v769 = vpop.f32.mrf.mxu0
      %770 = vmatprep.mubr.bf16.mxu0 0
      %771 = vmatmul.mubr.bf16.gmra.mxu0 %v642
      %v772 = vpop.f32.mrf.mxu0
      %v773 = vadd.f32 %v664, %v772
      %v774 = vpop.f32.mrf.mxu0
      %v775 = vpop.f32.mrf.mxu0
      %v776 = vadd.f32 %v664, %v775
      %v777 = vpop.f32.mrf.mxu0
      %778 = vdwg.mxu0
      %v779 = vxor.u32 %v749, 2147483648
      %v780 = vxor.u32 %v752, 2147483648
      %v781 = vxor.u32 %v757, 2147483648
      %v782 = vxor.u32 %v760, 2147483648
      %v783 = vxor.u32 %v765, 2147483648
      %v784 = vxor.u32 %v768, 2147483648
      %v785 = vxor.u32 %v773, 2147483648
      %v786 = vxor.u32 %v776, 2147483648
      %v787 = vmul.f32 %v779, 1.442695
      %v788 = vpow.pop %v787
      %v789 = vmul.f32 %v780, 1.442695
      %v790 = vpow.pop %v789
      %v791 = vmul.f32 %v781, 1.442695
      %v792 = vpow.pop %v791
      %v793 = vmul.f32 %v782, 1.442695
      %v794 = vpow.pop %v793
      %v795 = vmul.f32 %v783, 1.442695
      %v796 = vpow.pop %v795
      %v797 = vmul.f32 %v784, 1.442695
      %v798 = vpow.pop %v797
      %v799 = vmul.f32 %v785, 1.442695
      %v800 = vpow.pop %v799
      %v801 = vmul.f32 %v786, 1.442695
      %v802 = vpow.pop %v801
      %v803 = vadd.f32 %v788, 1.0
      %v804 = vadd.f32 %v790, 1.0
      %v805 = vadd.f32 %v792, 1.0
      %v806 = vadd.f32 %v794, 1.0
      %v807 = vadd.f32 %v796, 1.0
      %v808 = vadd.f32 %v798, 1.0
      %v809 = vadd.f32 %v800, 1.0
      %v810 = vadd.f32 %v802, 1.0
      %v811 = vrcp.pop %v803
      %v812 = vmul.f32 1.0, %v811
      %v813 = vrcp.pop %v804
      %v814 = vmul.f32 1.0, %v813
      %v815 = vrcp.pop %v805
      %v816 = vmul.f32 1.0, %v815
      %v817 = vrcp.pop %v806
      %v818 = vmul.f32 1.0, %v817
      %v819 = vrcp.pop %v807
      %v820 = vmul.f32 1.0, %v819
      %v821 = vrcp.pop %v808
      %v822 = vmul.f32 1.0, %v821
      %v823 = vrcp.pop %v809
      %v824 = vmul.f32 1.0, %v823
      %v825 = vrcp.pop %v810
      %v826 = vmul.f32 1.0, %v825
      %827 = vst [vmem:[%s280] sm:$0xff] %v812
      %828 = vst [vmem:[%s280 + $0x8] sm:$0xff] %v814
      %829 = vst [vmem:[%s280 + $0x10] sm:$0xff] %v816
      %830 = vst [vmem:[%s280 + $0x18] sm:$0xff] %v818
      %831 = vst [vmem:[%s280 + $0x20] sm:$0xff] %v820
      %832 = vst [vmem:[%s280 + $0x28] sm:$0xff] %v822
      %833 = vst [vmem:[%s280 + $0x30] sm:$0xff] %v824
      %834 = vst [vmem:[%s280 + $0x38] sm:$0xff] %v826
      %s835 = smul.u32 8, %s18
      %p836 = scmp.lt.s32.totalorder %s835, 31
      %s837 = scalar_select %p836, %s835, 31
      %s838 = smul.addr %s837, 8
      %s839 = scalar_lea.vmem %s7, %s838
      // Predicated region
      $region49: #{decoder_forward.1} parent=47 // pred_check
        %p840 = pneg %p188
      $region50: #{decoder_forward.1} parent=47 // pred_check_branch
        %842 = sbr.rel (%p840) target = $region52
      $region51: #{decoder_forward.1} parent=47 // pred_region
        %s843 = smul.u32 8, %s18
      $region52: #{decoder_forward.1} parent=47 // pred_fallthru
        _
    $region48: #{decoder_forward.1} parent=5 // pred_fallthru
      _
    %p844 = scmp.le.s32.totalorder 2, %s13
    // Predicated region
    $region53: #{decoder_forward.1} parent=5 // pred_check
      %p845 = pneg %p844
    $region54: #{decoder_forward.1} parent=5 // pred_check_branch
      %847 = sbr.rel (%p845) target = $region56
    $region55: #{decoder_forward.1} parent=5 // pred_region
      %s848 = ssub.s32 %s13, 2
      // Predicated region
      $region57: #{decoder_forward.1} parent=55 // pred_check
        %p849 = pneg %p194
      $region58: #{decoder_forward.1} parent=55 // pred_check_branch
        %851 = sbr.rel (%p849) target = $region60
      $region59: #{decoder_forward.1} parent=55 // pred_region
        %s852 = smul.u32 8, %s19
        %p853 = scmp.lt.s32.totalorder %s852, 31
        %s854 = scalar_select %p853, %s852, 31
        %s855 = smul.addr %s854, 8
        %s856 = scalar_lea.vmem %s7, %s855
      $region60: #{decoder_forward.1} parent=55 // pred_fallthru
        _
    $region56: #{decoder_forward.1} parent=5 // pred_fallthru
      _
  $region6: #{decoder_forward.1} parent=0 // loop_footer
    %s17 = sadd.s32 1, %s13
  $region7: #{decoder_forward.1} parent=0 // loop_footer_branch
    %12 = sbr.rel target = $region3
  $region8: #{decoder_forward.1} parent=0 // loop_exit
    _

</llo_original>
